<compile_context>
chip_gen: v5e
topology: v5e:2x2
jax: 0.10.0
libtpu: 0.0.40
codegen_flags: <defaults>
</compile_context>

<pallas_src>
import jax
import jax.numpy as jnp
import numpy as np
from jax.experimental import pallas as pl
from jax.experimental.pallas import tpu as pltpu

CHANNELS = 8
KERNEL_SIZE = 3
LRELU_SLOPE = 0.1
DILATIONS = (1, 3, 5)
N = 2
T = 128


def _leaky_relu(x):
    return jnp.where(x >= 0, x, LRELU_SLOPE * x)


def residual_block_kernel(x_ref, w1_ref, b1_ref, w2_ref, b2_ref, o_ref):
    # x_ref / o_ref : (N*C, T)            batch folded into sublanes
    # w*_ref        : (P, N*C, K*N*C)     block-diag over batch, im2col over taps
    # b*_ref        : (P, N*C, 1)
    x = x_ref[...]
    nc, t = x.shape
    lane = jax.lax.broadcasted_iota(jnp.int32, (nc, t), 1)

    def conv_same(h, w_ref, b_ref, pi, dil):
        # Taps at time offsets (-dil, 0, +dil)  ("same" padding, K=3).
        # pltpu.roll == np.roll semantics: roll(h, s)[.., t] = h[.., (t - s) % T]
        left = jnp.where(lane >= dil, pltpu.roll(h, dil, axis=1), 0.0)          # h[:, t-dil]
        right = jnp.where(lane < t - dil, pltpu.roll(h, t - dil, axis=1), 0.0)  # h[:, t+dil]
        stacked = jnp.concatenate([left, h, right], axis=0)                     # (3*NC, T)
        y = jnp.dot(w_ref[pi], stacked, preferred_element_type=jnp.float32)
        return y + b_ref[pi]                                                    # (NC,1) bcast

    for pi, dil in enumerate(DILATIONS):              # x += res_part(x)
        h = _leaky_relu(x)
        y1 = conv_same(h, w1_ref, b1_ref, pi, dil)    # dilated conv
        h2 = _leaky_relu(y1)
        y2 = conv_same(h2, w2_ref, b2_ref, pi, 1)     # dilation-1 conv
        x = x + y2
    o_ref[...] = x.astype(o_ref.dtype)


def residual_block(x, w1, b1, w2, b2):
    """x: (N, C, T); w*: (P, N*C, K*N*C) im2col block-diag; b*: (P, N*C, 1)."""
    n, c, t = x.shape
    p = len(DILATIONS)
    assert w1.shape == (p, n * c, KERNEL_SIZE * n * c), w1.shape
    assert w2.shape == (p, n * c, KERNEL_SIZE * n * c), w2.shape
    assert b1.shape == (p, n * c, 1) and b2.shape == (p, n * c, 1)
    # Layout guard: sublanes / lanes fill whole vregs at these sizes.
    assert (n * c) % 8 == 0 and t % 128 == 0, (n, c, t)

    xf = x.reshape(n * c, t)
    out = pl.pallas_call(          # no grid: one step, whole arrays in VMEM
        residual_block_kernel,
        out_shape=jax.ShapeDtypeStruct((n * c, t), x.dtype),
    )(xf, w1, b1, w2, b2)
    return out.reshape(n, c, t)


# ---------------- parameter construction (glue, deterministic) ----------------

def make_weight_norm_conv_params(key, channels, k):
    kv, kg, kb = jax.random.split(key, 3)
    v = jax.random.normal(kv, (channels, channels, k), jnp.float32) * 0.1
    g = 1.0 + 0.1 * jax.random.normal(kg, (channels,), jnp.float32)
    b = 0.1 * jax.random.normal(kb, (channels,), jnp.float32)
    norm = jnp.sqrt(jnp.sum(v * v, axis=(1, 2), keepdims=True))
    w = g[:, None, None] * v / norm            # (C_out, C_in, K), torch layout
    return w, b


def pack_weights_im2col_blockdiag(w_torch, n):
    """(P, C_out, C_in, K) torch layout -> (P, N*C_out, K*N*C_in).

    Column blocks ordered by tap k (offsets -d, 0, +d); each block is
    kron(eye(N), W[:, :, k]) so a single matmul covers the whole batch.
    """
    p, _, _, k = w_torch.shape
    eye = jnp.eye(n, dtype=w_torch.dtype)
    out = []
    for pi in range(p):
        cols = [jnp.kron(eye, w_torch[pi, :, :, kk]) for kk in range(k)]
        out.append(jnp.concatenate(cols, axis=1))
    return jnp.stack(out)


def pack_bias(b_all, n):
    """(P, C) -> (P, N*C, 1) with per-batch repetition."""
    return jnp.tile(b_all, (1, n))[:, :, None]


# ---------------- pure-JAX reference for verification -------------------------

def ref_forward(x, w1_t, b1_all, w2_t, b2_all):
    dn = ('NCH', 'OIH', 'NCH')
    for pi, dil in enumerate(DILATIONS):
        h = _leaky_relu(x)
        p1 = dil * (KERNEL_SIZE - 1) // 2
        y1 = jax.lax.conv_general_dilated(
            h, w1_t[pi], (1,), [(p1, p1)], rhs_dilation=(dil,),
            dimension_numbers=dn) + b1_all[pi][None, :, None]
        h2 = _leaky_relu(y1)
        p2 = (KERNEL_SIZE - 1) // 2
        y2 = jax.lax.conv_general_dilated(
            h2, w2_t[pi], (1,), [(p2, p2)], rhs_dilation=(1,),
            dimension_numbers=dn) + b2_all[pi][None, :, None]
        x = x + y2
    return x


if __name__ == "__main__":
    key = jax.random.PRNGKey(0)
    keys = jax.random.split(key, 1 + 2 * len(DILATIONS))
    x = jax.random.normal(keys[0], (N, CHANNELS, T), jnp.float32)

    w1_l, b1_l, w2_l, b2_l = [], [], [], []
    for i in range(len(DILATIONS)):
        w1, b1 = make_weight_norm_conv_params(keys[1 + 2 * i], CHANNELS, KERNEL_SIZE)
        w2, b2 = make_weight_norm_conv_params(keys[2 + 2 * i], CHANNELS, KERNEL_SIZE)
        w1_l.append(w1); b1_l.append(b1); w2_l.append(w2); b2_l.append(b2)

    w1_t = jnp.stack(w1_l)          # (P, C_out, C_in, K)  torch layout
    b1_all = jnp.stack(b1_l)        # (P, C)
    w2_t = jnp.stack(w2_l)
    b2_all = jnp.stack(b2_l)

    # kernel layout: block-diagonal-over-batch + im2col-over-taps weights
    w1_k = pack_weights_im2col_blockdiag(w1_t, N)   # (P, N*C, K*N*C)
    w2_k = pack_weights_im2col_blockdiag(w2_t, N)
    b1_k = pack_bias(b1_all, N)                     # (P, N*C, 1)
    b2_k = pack_bias(b2_all, N)

    out = residual_block(x, w1_k, b1_k, w2_k, b2_k)
    out = jax.block_until_ready(out)

    ref = ref_forward(x, w1_t, b1_all, w2_t, b2_all)
    assert np.allclose(np.asarray(out), np.asarray(ref), rtol=1e-4, atol=1e-4), \
        "Pallas kernel output does not match reference"
    print("KERNEL_OK")
</pallas_src>

<mosaic_0001>
module attributes {stable_mosaic.version = 11 : i64} {
  func.func @residual_block_kernel(%arg0: memref<16x128xf32, #tpu.memory_space<vmem>>, %arg1: memref<3x16x48xf32, #tpu.memory_space<vmem>>, %arg2: memref<3x16x1xf32, #tpu.memory_space<vmem>>, %arg3: memref<3x16x48xf32, #tpu.memory_space<vmem>>, %arg4: memref<3x16x1xf32, #tpu.memory_space<vmem>>, %arg5: memref<16x128xf32, #tpu.memory_space<vmem>>) attributes {dimension_semantics = [], scalar_prefetch = 0 : i64, scratch_operands = 0 : i64, tpu.core_type = #tpu.core_type<tc>} {
    %c0 = arith.constant 0 : index
    %c0_0 = arith.constant 0 : index
    %0 = vector.load %arg0[%c0, %c0_0] : memref<16x128xf32, #tpu.memory_space<vmem>>, vector<16x128xf32>
    %1 = tpu.iota {dimensions = array<i32: 1>} : vector<16x128xi32>
    %cst = arith.constant 0.000000e+00 : f32
    %2 = vector.broadcast %cst : f32 to vector<16x128xf32>
    %3 = arith.cmpf oge, %0, %2 : vector<16x128xf32>
    %cst_1 = arith.constant 1.000000e-01 : f32
    %4 = vector.broadcast %cst_1 : f32 to vector<16x128xf32>
    %5 = arith.mulf %4, %0 : vector<16x128xf32>
    %6 = arith.select %3, %0, %5 : vector<16x128xi1>, vector<16x128xf32>
    %c1_i32 = arith.constant 1 : i32
    %7 = vector.broadcast %c1_i32 : i32 to vector<16x128xi32>
    %8 = arith.cmpi sge, %1, %7 : vector<16x128xi32>
    %c1_i32_2 = arith.constant 1 : i32
    %9 = tpu.dynamic_rotate %6 by %c1_i32_2 dim 1 : vector<16x128xf32>, i32 -> vector<16x128xf32>
    %cst_3 = arith.constant 0.000000e+00 : f32
    %10 = vector.broadcast %cst_3 : f32 to vector<16x128xf32>
    %11 = arith.select %8, %9, %10 : vector<16x128xi1>, vector<16x128xf32>
    %c127_i32 = arith.constant 127 : i32
    %12 = vector.broadcast %c127_i32 : i32 to vector<16x128xi32>
    %13 = arith.cmpi slt, %1, %12 : vector<16x128xi32>
    %c127_i32_4 = arith.constant 127 : i32
    %14 = tpu.dynamic_rotate %6 by %c127_i32_4 dim 1 : vector<16x128xf32>, i32 -> vector<16x128xf32>
    %cst_5 = arith.constant 0.000000e+00 : f32
    %15 = vector.broadcast %cst_5 : f32 to vector<16x128xf32>
    %16 = arith.select %13, %14, %15 : vector<16x128xi1>, vector<16x128xf32>
    %17 = tpu.concatenate %11, %6, %16 in 0 : vector<16x128xf32>, vector<16x128xf32>, vector<16x128xf32> -> vector<48x128xf32>
    %c0_6 = arith.constant 0 : index
    %c0_7 = arith.constant 0 : index
    %c0_8 = arith.constant 0 : index
    %18 = vector.load %arg1[%c0_6, %c0_7, %c0_8] : memref<3x16x48xf32, #tpu.memory_space<vmem>>, vector<1x16x48xf32>
    %19 = vector.shape_cast %18 : vector<1x16x48xf32> to vector<16x48xf32>
    %cst_9 = arith.constant dense<0.000000e+00> : vector<16x128xf32>
    %20 = tpu.matmul %19, %17, %cst_9 {dimension_numbers = #tpu.dot_dimension_numbers<[1], [0], [0], [1], [0, 0, 1, 1], [], []>} : vector<16x48xf32>, vector<48x128xf32>, vector<16x128xf32> -> vector<16x128xf32>
    %c0_10 = arith.constant 0 : index
    %c0_11 = arith.constant 0 : index
    %c0_12 = arith.constant 0 : index
    %21 = vector.load %arg2[%c0_10, %c0_11, %c0_12] : memref<3x16x1xf32, #tpu.memory_space<vmem>>, vector<1x16x1xf32>
    %22 = vector.shape_cast %21 : vector<1x16x1xf32> to vector<16x1xf32>
    %23 = vector.broadcast %22 : vector<16x1xf32> to vector<16x128xf32>
    %24 = arith.addf %20, %23 : vector<16x128xf32>
    %cst_13 = arith.constant 0.000000e+00 : f32
    %25 = vector.broadcast %cst_13 : f32 to vector<16x128xf32>
    %26 = arith.cmpf oge, %24, %25 : vector<16x128xf32>
    %cst_14 = arith.constant 1.000000e-01 : f32
    %27 = vector.broadcast %cst_14 : f32 to vector<16x128xf32>
    %28 = arith.mulf %27, %24 : vector<16x128xf32>
    %29 = arith.select %26, %24, %28 : vector<16x128xi1>, vector<16x128xf32>
    %c1_i32_15 = arith.constant 1 : i32
    %30 = vector.broadcast %c1_i32_15 : i32 to vector<16x128xi32>
    %31 = arith.cmpi sge, %1, %30 : vector<16x128xi32>
    %c1_i32_16 = arith.constant 1 : i32
    %32 = tpu.dynamic_rotate %29 by %c1_i32_16 dim 1 : vector<16x128xf32>, i32 -> vector<16x128xf32>
    %cst_17 = arith.constant 0.000000e+00 : f32
    %33 = vector.broadcast %cst_17 : f32 to vector<16x128xf32>
    %34 = arith.select %31, %32, %33 : vector<16x128xi1>, vector<16x128xf32>
    %c127_i32_18 = arith.constant 127 : i32
    %35 = vector.broadcast %c127_i32_18 : i32 to vector<16x128xi32>
    %36 = arith.cmpi slt, %1, %35 : vector<16x128xi32>
    %c127_i32_19 = arith.constant 127 : i32
    %37 = tpu.dynamic_rotate %29 by %c127_i32_19 dim 1 : vector<16x128xf32>, i32 -> vector<16x128xf32>
    %cst_20 = arith.constant 0.000000e+00 : f32
    %38 = vector.broadcast %cst_20 : f32 to vector<16x128xf32>
    %39 = arith.select %36, %37, %38 : vector<16x128xi1>, vector<16x128xf32>
    %40 = tpu.concatenate %34, %29, %39 in 0 : vector<16x128xf32>, vector<16x128xf32>, vector<16x128xf32> -> vector<48x128xf32>
    %c0_21 = arith.constant 0 : index
    %c0_22 = arith.constant 0 : index
    %c0_23 = arith.constant 0 : index
    %41 = vector.load %arg3[%c0_21, %c0_22, %c0_23] : memref<3x16x48xf32, #tpu.memory_space<vmem>>, vector<1x16x48xf32>
    %42 = vector.shape_cast %41 : vector<1x16x48xf32> to vector<16x48xf32>
    %cst_24 = arith.constant dense<0.000000e+00> : vector<16x128xf32>
    %43 = tpu.matmul %42, %40, %cst_24 {dimension_numbers = #tpu.dot_dimension_numbers<[1], [0], [0], [1], [0, 0, 1, 1], [], []>} : vector<16x48xf32>, vector<48x128xf32>, vector<16x128xf32> -> vector<16x128xf32>
    %c0_25 = arith.constant 0 : index
    %c0_26 = arith.constant 0 : index
    %c0_27 = arith.constant 0 : index
    %44 = vector.load %arg4[%c0_25, %c0_26, %c0_27] : memref<3x16x1xf32, #tpu.memory_space<vmem>>, vector<1x16x1xf32>
    %45 = vector.shape_cast %44 : vector<1x16x1xf32> to vector<16x1xf32>
    %46 = vector.broadcast %45 : vector<16x1xf32> to vector<16x128xf32>
    %47 = arith.addf %43, %46 : vector<16x128xf32>
    %48 = arith.addf %0, %47 : vector<16x128xf32>
    %cst_28 = arith.constant 0.000000e+00 : f32
    %49 = vector.broadcast %cst_28 : f32 to vector<16x128xf32>
    %50 = arith.cmpf oge, %48, %49 : vector<16x128xf32>
    %cst_29 = arith.constant 1.000000e-01 : f32
    %51 = vector.broadcast %cst_29 : f32 to vector<16x128xf32>
    %52 = arith.mulf %51, %48 : vector<16x128xf32>
    %53 = arith.select %50, %48, %52 : vector<16x128xi1>, vector<16x128xf32>
    %c3_i32 = arith.constant 3 : i32
    %54 = vector.broadcast %c3_i32 : i32 to vector<16x128xi32>
    %55 = arith.cmpi sge, %1, %54 : vector<16x128xi32>
    %c3_i32_30 = arith.constant 3 : i32
    %56 = tpu.dynamic_rotate %53 by %c3_i32_30 dim 1 : vector<16x128xf32>, i32 -> vector<16x128xf32>
    %cst_31 = arith.constant 0.000000e+00 : f32
    %57 = vector.broadcast %cst_31 : f32 to vector<16x128xf32>
    %58 = arith.select %55, %56, %57 : vector<16x128xi1>, vector<16x128xf32>
    %c125_i32 = arith.constant 125 : i32
    %59 = vector.broadcast %c125_i32 : i32 to vector<16x128xi32>
    %60 = arith.cmpi slt, %1, %59 : vector<16x128xi32>
    %c125_i32_32 = arith.constant 125 : i32
    %61 = tpu.dynamic_rotate %53 by %c125_i32_32 dim 1 : vector<16x128xf32>, i32 -> vector<16x128xf32>
    %cst_33 = arith.constant 0.000000e+00 : f32
    %62 = vector.broadcast %cst_33 : f32 to vector<16x128xf32>
    %63 = arith.select %60, %61, %62 : vector<16x128xi1>, vector<16x128xf32>
    %64 = tpu.concatenate %58, %53, %63 in 0 : vector<16x128xf32>, vector<16x128xf32>, vector<16x128xf32> -> vector<48x128xf32>
    %c1 = arith.constant 1 : index
    %c0_34 = arith.constant 0 : index
    %c0_35 = arith.constant 0 : index
    %65 = vector.load %arg1[%c1, %c0_34, %c0_35] : memref<3x16x48xf32, #tpu.memory_space<vmem>>, vector<1x16x48xf32>
    %66 = vector.shape_cast %65 : vector<1x16x48xf32> to vector<16x48xf32>
    %cst_36 = arith.constant dense<0.000000e+00> : vector<16x128xf32>
    %67 = tpu.matmul %66, %64, %cst_36 {dimension_numbers = #tpu.dot_dimension_numbers<[1], [0], [0], [1], [0, 0, 1, 1], [], []>} : vector<16x48xf32>, vector<48x128xf32>, vector<16x128xf32> -> vector<16x128xf32>
    %c1_37 = arith.constant 1 : index
    %c0_38 = arith.constant 0 : index
    %c0_39 = arith.constant 0 : index
    %68 = vector.load %arg2[%c1_37, %c0_38, %c0_39] : memref<3x16x1xf32, #tpu.memory_space<vmem>>, vector<1x16x1xf32>
    %69 = vector.shape_cast %68 : vector<1x16x1xf32> to vector<16x1xf32>
    %70 = vector.broadcast %69 : vector<16x1xf32> to vector<16x128xf32>
    %71 = arith.addf %67, %70 : vector<16x128xf32>
    %cst_40 = arith.constant 0.000000e+00 : f32
    %72 = vector.broadcast %cst_40 : f32 to vector<16x128xf32>
    %73 = arith.cmpf oge, %71, %72 : vector<16x128xf32>
    %cst_41 = arith.constant 1.000000e-01 : f32
    %74 = vector.broadcast %cst_41 : f32 to vector<16x128xf32>
    %75 = arith.mulf %74, %71 : vector<16x128xf32>
    %76 = arith.select %73, %71, %75 : vector<16x128xi1>, vector<16x128xf32>
    %c1_i32_42 = arith.constant 1 : i32
    %77 = vector.broadcast %c1_i32_42 : i32 to vector<16x128xi32>
    %78 = arith.cmpi sge, %1, %77 : vector<16x128xi32>
    %c1_i32_43 = arith.constant 1 : i32
    %79 = tpu.dynamic_rotate %76 by %c1_i32_43 dim 1 : vector<16x128xf32>, i32 -> vector<16x128xf32>
    %cst_44 = arith.constant 0.000000e+00 : f32
    %80 = vector.broadcast %cst_44 : f32 to vector<16x128xf32>
    %81 = arith.select %78, %79, %80 : vector<16x128xi1>, vector<16x128xf32>
    %c127_i32_45 = arith.constant 127 : i32
    %82 = vector.broadcast %c127_i32_45 : i32 to vector<16x128xi32>
    %83 = arith.cmpi slt, %1, %82 : vector<16x128xi32>
    %c127_i32_46 = arith.constant 127 : i32
    %84 = tpu.dynamic_rotate %76 by %c127_i32_46 dim 1 : vector<16x128xf32>, i32 -> vector<16x128xf32>
    %cst_47 = arith.constant 0.000000e+00 : f32
    %85 = vector.broadcast %cst_47 : f32 to vector<16x128xf32>
    %86 = arith.select %83, %84, %85 : vector<16x128xi1>, vector<16x128xf32>
    %87 = tpu.concatenate %81, %76, %86 in 0 : vector<16x128xf32>, vector<16x128xf32>, vector<16x128xf32> -> vector<48x128xf32>
    %c1_48 = arith.constant 1 : index
    %c0_49 = arith.constant 0 : index
    %c0_50 = arith.constant 0 : index
    %88 = vector.load %arg3[%c1_48, %c0_49, %c0_50] : memref<3x16x48xf32, #tpu.memory_space<vmem>>, vector<1x16x48xf32>
    %89 = vector.shape_cast %88 : vector<1x16x48xf32> to vector<16x48xf32>
    %cst_51 = arith.constant dense<0.000000e+00> : vector<16x128xf32>
    %90 = tpu.matmul %89, %87, %cst_51 {dimension_numbers = #tpu.dot_dimension_numbers<[1], [0], [0], [1], [0, 0, 1, 1], [], []>} : vector<16x48xf32>, vector<48x128xf32>, vector<16x128xf32> -> vector<16x128xf32>
    %c1_52 = arith.constant 1 : index
    %c0_53 = arith.constant 0 : index
    %c0_54 = arith.constant 0 : index
    %91 = vector.load %arg4[%c1_52, %c0_53, %c0_54] : memref<3x16x1xf32, #tpu.memory_space<vmem>>, vector<1x16x1xf32>
    %92 = vector.shape_cast %91 : vector<1x16x1xf32> to vector<16x1xf32>
    %93 = vector.broadcast %92 : vector<16x1xf32> to vector<16x128xf32>
    %94 = arith.addf %90, %93 : vector<16x128xf32>
    %95 = arith.addf %48, %94 : vector<16x128xf32>
    %cst_55 = arith.constant 0.000000e+00 : f32
    %96 = vector.broadcast %cst_55 : f32 to vector<16x128xf32>
    %97 = arith.cmpf oge, %95, %96 : vector<16x128xf32>
    %cst_56 = arith.constant 1.000000e-01 : f32
    %98 = vector.broadcast %cst_56 : f32 to vector<16x128xf32>
    %99 = arith.mulf %98, %95 : vector<16x128xf32>
    %100 = arith.select %97, %95, %99 : vector<16x128xi1>, vector<16x128xf32>
    %c5_i32 = arith.constant 5 : i32
    %101 = vector.broadcast %c5_i32 : i32 to vector<16x128xi32>
    %102 = arith.cmpi sge, %1, %101 : vector<16x128xi32>
    %c5_i32_57 = arith.constant 5 : i32
    %103 = tpu.dynamic_rotate %100 by %c5_i32_57 dim 1 : vector<16x128xf32>, i32 -> vector<16x128xf32>
    %cst_58 = arith.constant 0.000000e+00 : f32
    %104 = vector.broadcast %cst_58 : f32 to vector<16x128xf32>
    %105 = arith.select %102, %103, %104 : vector<16x128xi1>, vector<16x128xf32>
    %c123_i32 = arith.constant 123 : i32
    %106 = vector.broadcast %c123_i32 : i32 to vector<16x128xi32>
    %107 = arith.cmpi slt, %1, %106 : vector<16x128xi32>
    %c123_i32_59 = arith.constant 123 : i32
    %108 = tpu.dynamic_rotate %100 by %c123_i32_59 dim 1 : vector<16x128xf32>, i32 -> vector<16x128xf32>
    %cst_60 = arith.constant 0.000000e+00 : f32
    %109 = vector.broadcast %cst_60 : f32 to vector<16x128xf32>
    %110 = arith.select %107, %108, %109 : vector<16x128xi1>, vector<16x128xf32>
    %111 = tpu.concatenate %105, %100, %110 in 0 : vector<16x128xf32>, vector<16x128xf32>, vector<16x128xf32> -> vector<48x128xf32>
    %c2 = arith.constant 2 : index
    %c0_61 = arith.constant 0 : index
    %c0_62 = arith.constant 0 : index
    %112 = vector.load %arg1[%c2, %c0_61, %c0_62] : memref<3x16x48xf32, #tpu.memory_space<vmem>>, vector<1x16x48xf32>
    %113 = vector.shape_cast %112 : vector<1x16x48xf32> to vector<16x48xf32>
    %cst_63 = arith.constant dense<0.000000e+00> : vector<16x128xf32>
    %114 = tpu.matmul %113, %111, %cst_63 {dimension_numbers = #tpu.dot_dimension_numbers<[1], [0], [0], [1], [0, 0, 1, 1], [], []>} : vector<16x48xf32>, vector<48x128xf32>, vector<16x128xf32> -> vector<16x128xf32>
    %c2_64 = arith.constant 2 : index
    %c0_65 = arith.constant 0 : index
    %c0_66 = arith.constant 0 : index
    %115 = vector.load %arg2[%c2_64, %c0_65, %c0_66] : memref<3x16x1xf32, #tpu.memory_space<vmem>>, vector<1x16x1xf32>
    %116 = vector.shape_cast %115 : vector<1x16x1xf32> to vector<16x1xf32>
    %117 = vector.broadcast %116 : vector<16x1xf32> to vector<16x128xf32>
    %118 = arith.addf %114, %117 : vector<16x128xf32>
    %cst_67 = arith.constant 0.000000e+00 : f32
    %119 = vector.broadcast %cst_67 : f32 to vector<16x128xf32>
    %120 = arith.cmpf oge, %118, %119 : vector<16x128xf32>
    %cst_68 = arith.constant 1.000000e-01 : f32
    %121 = vector.broadcast %cst_68 : f32 to vector<16x128xf32>
    %122 = arith.mulf %121, %118 : vector<16x128xf32>
    %123 = arith.select %120, %118, %122 : vector<16x128xi1>, vector<16x128xf32>
    %c1_i32_69 = arith.constant 1 : i32
    %124 = vector.broadcast %c1_i32_69 : i32 to vector<16x128xi32>
    %125 = arith.cmpi sge, %1, %124 : vector<16x128xi32>
    %c1_i32_70 = arith.constant 1 : i32
    %126 = tpu.dynamic_rotate %123 by %c1_i32_70 dim 1 : vector<16x128xf32>, i32 -> vector<16x128xf32>
    %cst_71 = arith.constant 0.000000e+00 : f32
    %127 = vector.broadcast %cst_71 : f32 to vector<16x128xf32>
    %128 = arith.select %125, %126, %127 : vector<16x128xi1>, vector<16x128xf32>
    %c127_i32_72 = arith.constant 127 : i32
    %129 = vector.broadcast %c127_i32_72 : i32 to vector<16x128xi32>
    %130 = arith.cmpi slt, %1, %129 : vector<16x128xi32>
    %c127_i32_73 = arith.constant 127 : i32
    %131 = tpu.dynamic_rotate %123 by %c127_i32_73 dim 1 : vector<16x128xf32>, i32 -> vector<16x128xf32>
    %cst_74 = arith.constant 0.000000e+00 : f32
    %132 = vector.broadcast %cst_74 : f32 to vector<16x128xf32>
    %133 = arith.select %130, %131, %132 : vector<16x128xi1>, vector<16x128xf32>
    %134 = tpu.concatenate %128, %123, %133 in 0 : vector<16x128xf32>, vector<16x128xf32>, vector<16x128xf32> -> vector<48x128xf32>
    %c2_75 = arith.constant 2 : index
    %c0_76 = arith.constant 0 : index
    %c0_77 = arith.constant 0 : index
    %135 = vector.load %arg3[%c2_75, %c0_76, %c0_77] : memref<3x16x48xf32, #tpu.memory_space<vmem>>, vector<1x16x48xf32>
    %136 = vector.shape_cast %135 : vector<1x16x48xf32> to vector<16x48xf32>
    %cst_78 = arith.constant dense<0.000000e+00> : vector<16x128xf32>
    %137 = tpu.matmul %136, %134, %cst_78 {dimension_numbers = #tpu.dot_dimension_numbers<[1], [0], [0], [1], [0, 0, 1, 1], [], []>} : vector<16x48xf32>, vector<48x128xf32>, vector<16x128xf32> -> vector<16x128xf32>
    %c2_79 = arith.constant 2 : index
    %c0_80 = arith.constant 0 : index
    %c0_81 = arith.constant 0 : index
    %138 = vector.load %arg4[%c2_79, %c0_80, %c0_81] : memref<3x16x1xf32, #tpu.memory_space<vmem>>, vector<1x16x1xf32>
    %139 = vector.shape_cast %138 : vector<1x16x1xf32> to vector<16x1xf32>
    %140 = vector.broadcast %139 : vector<16x1xf32> to vector<16x128xf32>
    %141 = arith.addf %137, %140 : vector<16x128xf32>
    %142 = arith.addf %95, %141 : vector<16x128xf32>
    %c0_82 = arith.constant 0 : index
    %c0_83 = arith.constant 0 : index
    %143 = vector.load %arg5[%c0_82, %c0_83] : memref<16x128xf32, #tpu.memory_space<vmem>>, vector<16x128xf32>
    tpu.vector_store %arg5[%c0_82, %c0_83], %142 {strides = array<i32>} : memref<16x128xf32, #tpu.memory_space<vmem>>, vector<16x128xf32>,
    return
  }
}

</mosaic_0001>

<llo_original>
// kernel: tpu_custom_call.1
$region0: #{tpu_custom_call.1}
  #allocation0 [shape = 'u32[]', space=smem, size = 0x4, offset = 0x4, fixed_abs, tag = 'smem constant byte address 0x4 - core index']
  #allocation1 [shape = 'u32[72,128]{1,0:T(1,128)}', space=vmem, size = 0x9000, scoped, tag = 'internal scratch']
  %s0 = inlined_call_operand.hbm [shape: f32[16,128], index: 0, kind: input, shape index: {}]
  %s1 = inlined_call_operand.vmem [shape: f32[3,16,48], index: 1, kind: input, shape index: {}]
  %s2 = inlined_call_operand.vmem [shape: f32[3,16,1], index: 2, kind: input, shape index: {}]
  %s3 = inlined_call_operand.vmem [shape: f32[3,16,48], index: 3, kind: input, shape index: {}]
  %s4 = inlined_call_operand.vmem [shape: f32[3,16,1], index: 4, kind: input, shape index: {}]
  %s5 = inlined_call_operand.hbm [shape: f32[16,128], index: 5, kind: output, shape index: {}]
  %s6 = sld [smem:[#allocation0]]
  $region34: #{tpu_custom_call.1} parent=0
    _
  %s8 = ssub.s32 1, %s6
  %s9 = scalar_select 0, %s8, %s6
  $region1: #{tpu_custom_call.1} parent=0
    #allocation2 [shape = 'u8[8192]{0}', space=vmem, size = 0x2000, scoped, tag = 'input window, operand 0, single buffered']
    #allocation3 [shape = 's32[1]{0}', space=sflag, size = 0x4, scoped, tag = 'scoped memory for tpu_custom_call.1']
    #allocation4 [shape = 's32[1]{0}', space=sflag, size = 0x4, scoped, tag = 'scoped memory for tpu_custom_call.1']
    #allocation5 [shape = 'u8[8192]{0}', space=vmem, size = 0x2000, scoped, tag = 'output window, operand 0, single buffered']
    %10 = vsyncpa [#allocation3], 0
    %11 = vsyncpa [#allocation4], 0
    // Predicated region
    $region2: #{tpu_custom_call.1} parent=1 // pred_check
      _
    $region3: #{tpu_custom_call.1} parent=1 // pred_check_branch
      %13 = sbr.rel (0) target = $region5
    $region4: #{tpu_custom_call.1} parent=1 // pred_region
      %15 = vsyncadd [#allocation3], 0
      %s16 = sshll.u32 %s0, 4
      %s17 = int_to_ptr.hbm [resolvable:$true] %s16
      %s18 = sshll.u32 [#allocation2], 4
      %s19 = int_to_ptr.vmem [resolvable:$true] %s18
      %24 = dma.hbm_to_vmem [thread:$0]  %s17, 256, %s19, [#allocation3], 128, 128, 8
    $region5: #{tpu_custom_call.1} parent=1 // pred_fallthru
      _
    // Predicated region
    $region6: #{tpu_custom_call.1} parent=1 // pred_check
      _
    $region7: #{tpu_custom_call.1} parent=1 // pred_check_branch
      %26 = sbr.rel (0) target = $region9
    $region8: #{tpu_custom_call.1} parent=1 // pred_region
      _
    $region9: #{tpu_custom_call.1} parent=1 // pred_fallthru
      _
    // Predicated region
    $region10: #{tpu_custom_call.1} parent=1 // pred_check
      _
    $region11: #{tpu_custom_call.1} parent=1 // pred_check_branch
      %28 = sbr.rel (0) target = $region13
    $region12: #{tpu_custom_call.1} parent=1 // pred_region
      _
    $region13: #{tpu_custom_call.1} parent=1 // pred_fallthru
      _
    // Predicated region
    $region14: #{tpu_custom_call.1} parent=1 // pred_check
      _
    $region15: #{tpu_custom_call.1} parent=1 // pred_check_branch
      %30 = sbr.rel (0) target = $region17
    $region16: #{tpu_custom_call.1} parent=1 // pred_region
      _
    $region17: #{tpu_custom_call.1} parent=1 // pred_fallthru
      _
    // Predicated region
    $region18: #{tpu_custom_call.1} parent=1 // pred_check
      _
    $region19: #{tpu_custom_call.1} parent=1 // pred_check_branch
      %32 = sbr.rel (0) target = $region21
    $region20: #{tpu_custom_call.1} parent=1 // pred_region
      _
    $region21: #{tpu_custom_call.1} parent=1 // pred_fallthru
      _
    // Predicated region
    $region22: #{tpu_custom_call.1} parent=1 // pred_check
      _
    $region23: #{tpu_custom_call.1} parent=1 // pred_check_branch
      %34 = sbr.rel (0) target = $region25
    $region24: #{tpu_custom_call.1} parent=1 // pred_region
      %36 = dma.done [#allocation3], 256
    $region25: #{tpu_custom_call.1} parent=1 // pred_fallthru
      _
    %v37 = vld [vmem:[#allocation2] sm:$0xff]
    %v38 = vld [vmem:[#allocation2 + $0x8] sm:$0xff]
    %v39 = vlaneseq
    %v40 = vand.u32 %v39, 127
    %vm41 = vcmp.ge.f32.partialorder %v37, 0.0
    %vm42 = vcmp.ge.f32.partialorder %v38, 0.0
    %v43 = vmul.f32 %v37, 0.1
    %v44 = vmul.f32 %v38, 0.1
    %v45 = vsel %vm41, %v37, %v43
    %v46 = vsel %vm42, %v38, %v44
    %vm47 = vcmp.ge.s32.totalorder %v40, 1
    %48 = vrot.lane.b32.xlu0 %v45, 1
    %v49 = vpop.permute.xlu0 %48
    %50 = vrot.lane.b32.xlu0 %v46, 1
    %v51 = vpop.permute.xlu0 %50
    %v52 = vsel %vm47, %v49, 0.0
    %v53 = vsel %vm47, %v51, 0.0
    %vm54 = vcmp.lt.s32.totalorder %v40, 127
    %55 = vrot.lane.b32.xlu0 %v45, 127
    %v56 = vpop.permute.xlu0 %55
    %57 = vrot.lane.b32.xlu0 %v46, 127
    %v58 = vpop.permute.xlu0 %57
    %v59 = vsel %vm54, %v56, 0.0
    %v60 = vsel %vm54, %v58, 0.0
    %v61 = vld [vmem:[%s1] sm:$0xff]
    %v62 = vld [vmem:[%s1 + $0x8] sm:$0xff]
    %v63 = vld [vmem:[%s2] sm:$0xff]
    %v64 = vld [vmem:[%s2 + $0x8] sm:$0xff]
    %66 = vset.pattern.permute.xlu0 0
    %67 = vperm.xlu0 %66, %v63
    %v68 = vpop.permute.xlu0 %67
    %71 = vset.pattern.permute.xlu0 0
    %72 = vperm.xlu0 %71, %v64
    %v73 = vpop.permute.xlu0 %72
    %vm75 = vcmask 392192
    %v77 = vsel %vm75, %v61, 0
    %v80 = vsel %vm75, %v62, 0
    %82 = vmatpush.msra.mxu0 0.0
    %83 = vmatpush.msra.mxu0 0.0
    %84 = vmatpush.msra.mxu0 0.0
    %85 = vmatpush.msra.mxu0 0.0
    %86 = vmatpush.msra.mxu0 0.0
    %87 = vmatpush.msra.mxu0 0.0
    %88 = vmatpush.msra.mxu0 0.0
    %89 = vmatpush.msra.mxu0 0.0
    %90 = vmatpush.msra.mxu0 0.0
    %91 = vmatpush.msra.mxu0 0.0
    %92 = vmatpush.msra.mxu0 %v60
    %93 = vmatpush.msra.mxu0 %v59
    %94 = vmatpush.msra.mxu0 %v46
    %95 = vmatpush.msra.mxu0 %v45
    %96 = vmatpush.msra.mxu0 %v53
    %97 = vmatpush.msra.mxu0 %v52
    %98 = vmatmul.f32.gmra.mxu0 %v77
    %v99 = vpop.f32.mrf.mxu0
    %v100 = vadd.f32 %v68, %v99
    %101 = vmatmul.f32.gmra.mxu0 %v80
    %v102 = vpop.f32.mrf.mxu0
    %v103 = vadd.f32 %v73, %v102
    %104 = vdwg.mxu0
    %vm105 = vcmp.ge.f32.partialorder %v100, 0.0
    %vm106 = vcmp.ge.f32.partialorder %v103, 0.0
    %v107 = vmul.f32 %v100, 0.1
    %v108 = vmul.f32 %v103, 0.1
    %v109 = vsel %vm105, %v100, %v107
    %v110 = vsel %vm106, %v103, %v108
    %111 = vrot.lane.b32.xlu0 %v109, 1
    %v112 = vpop.permute.xlu0 %111
    %113 = vrot.lane.b32.xlu0 %v110, 1
    %v114 = vpop.permute.xlu0 %113
    %v115 = vsel %vm47, %v112, 0.0
    %v116 = vsel %vm47, %v114, 0.0
    %117 = vrot.lane.b32.xlu0 %v109, 127
    %v118 = vpop.permute.xlu0 %117
    %119 = vrot.lane.b32.xlu0 %v110, 127
    %v120 = vpop.permute.xlu0 %119
    %v121 = vsel %vm54, %v118, 0.0
    %v122 = vsel %vm54, %v120, 0.0
    %v123 = vld [vmem:[%s3] sm:$0xff]
    %v124 = vld [vmem:[%s3 + $0x8] sm:$0xff]
    %v125 = vld [vmem:[%s4] sm:$0xff]
    %v126 = vld [vmem:[%s4 + $0x8] sm:$0xff]
    %128 = vset.pattern.permute.xlu0 0
    %129 = vperm.xlu0 %128, %v125
    %v130 = vpop.permute.xlu0 %129
    %133 = vset.pattern.permute.xlu0 0
    %134 = vperm.xlu0 %133, %v126
    %v135 = vpop.permute.xlu0 %134
    %v138 = vsel %vm75, %v123, 0
    %v141 = vsel %vm75, %v124, 0
    %143 = vmatpush.msra.mxu0 0.0
    %144 = vmatpush.msra.mxu0 0.0
    %145 = vmatpush.msra.mxu0 0.0
    %146 = vmatpush.msra.mxu0 0.0
    %147 = vmatpush.msra.mxu0 0.0
    %148 = vmatpush.msra.mxu0 0.0
    %149 = vmatpush.msra.mxu0 0.0
    %150 = vmatpush.msra.mxu0 0.0
    %151 = vmatpush.msra.mxu0 0.0
    %152 = vmatpush.msra.mxu0 0.0
    %153 = vmatpush.msra.mxu0 %v122
    %154 = vmatpush.msra.mxu0 %v121
    %155 = vmatpush.msra.mxu0 %v110
    %156 = vmatpush.msra.mxu0 %v109
    %157 = vmatpush.msra.mxu0 %v116
    %158 = vmatpush.msra.mxu0 %v115
    %159 = vmatmul.f32.gmra.mxu0 %v138
    %v160 = vpop.f32.mrf.mxu0
    %v161 = vadd.f32 %v130, %v160
    %162 = vmatmul.f32.gmra.mxu0 %v141
    %v163 = vpop.f32.mrf.mxu0
    %v164 = vadd.f32 %v135, %v163
    %165 = vdwg.mxu0
    %v166 = vadd.f32 %v37, %v161
    %v167 = vadd.f32 %v38, %v164
    %vm168 = vcmp.ge.f32.partialorder %v166, 0.0
    %vm169 = vcmp.ge.f32.partialorder %v167, 0.0
    %v170 = vmul.f32 %v166, 0.1
    %v171 = vmul.f32 %v167, 0.1
    %v172 = vsel %vm168, %v166, %v170
    %v173 = vsel %vm169, %v167, %v171
    %vm174 = vcmp.ge.s32.totalorder %v40, 3
    %175 = vrot.lane.b32.xlu0 %v172, 3
    %v176 = vpop.permute.xlu0 %175
    %177 = vrot.lane.b32.xlu0 %v173, 3
    %v178 = vpop.permute.xlu0 %177
    %v179 = vsel %vm174, %v176, 0.0
    %v180 = vsel %vm174, %v178, 0.0
    %vm181 = vcmp.lt.s32.totalorder %v40, 125
    %182 = vrot.lane.b32.xlu0 %v172, 125
    %v183 = vpop.permute.xlu0 %182
    %184 = vrot.lane.b32.xlu0 %v173, 125
    %v185 = vpop.permute.xlu0 %184
    %v186 = vsel %vm181, %v183, 0.0
    %v187 = vsel %vm181, %v185, 0.0
    %s188 = scalar_lea.vmem %s1, 16
    %v189 = vld [vmem:[%s188] sm:$0xff]
    %v190 = vld [vmem:[%s188 + $0x8] sm:$0xff]
    %s191 = scalar_lea.vmem %s2, 16
    %v192 = vld [vmem:[%s191] sm:$0xff]
    %v193 = vld [vmem:[%s191 + $0x8] sm:$0xff]
    %195 = vset.pattern.permute.xlu0 0
    %196 = vperm.xlu0 %195, %v192
    %v197 = vpop.permute.xlu0 %196
    %200 = vset.pattern.permute.xlu0 0
    %201 = vperm.xlu0 %200, %v193
    %v202 = vpop.permute.xlu0 %201
    %v205 = vsel %vm75, %v189, 0
    %v208 = vsel %vm75, %v190, 0
    %210 = vmatpush.msra.mxu0 0.0
    %211 = vmatpush.msra.mxu0 0.0
    %212 = vmatpush.msra.mxu0 0.0
    %213 = vmatpush.msra.mxu0 0.0
    %214 = vmatpush.msra.mxu0 0.0
    %215 = vmatpush.msra.mxu0 0.0
    %216 = vmatpush.msra.mxu0 0.0
    %217 = vmatpush.msra.mxu0 0.0
    %218 = vmatpush.msra.mxu0 0.0
    %219 = vmatpush.msra.mxu0 0.0
    %220 = vmatpush.msra.mxu0 %v187
    %221 = vmatpush.msra.mxu0 %v186
    %222 = vmatpush.msra.mxu0 %v173
    %223 = vmatpush.msra.mxu0 %v172
    %224 = vmatpush.msra.mxu0 %v180
    %225 = vmatpush.msra.mxu0 %v179
    %226 = vmatmul.f32.gmra.mxu0 %v205
    %v227 = vpop.f32.mrf.mxu0
    %v228 = vadd.f32 %v197, %v227
    %229 = vmatmul.f32.gmra.mxu0 %v208
    %v230 = vpop.f32.mrf.mxu0
    %v231 = vadd.f32 %v202, %v230
    %232 = vdwg.mxu0
    %vm233 = vcmp.ge.f32.partialorder %v228, 0.0
    %vm234 = vcmp.ge.f32.partialorder %v231, 0.0
    %v235 = vmul.f32 %v228, 0.1
    %v236 = vmul.f32 %v231, 0.1
    %v237 = vsel %vm233, %v228, %v235
    %v238 = vsel %vm234, %v231, %v236
    %239 = vrot.lane.b32.xlu0 %v237, 1
    %v240 = vpop.permute.xlu0 %239
    %241 = vrot.lane.b32.xlu0 %v238, 1
    %v242 = vpop.permute.xlu0 %241
    %v243 = vsel %vm47, %v240, 0.0
    %v244 = vsel %vm47, %v242, 0.0
    %245 = vrot.lane.b32.xlu0 %v237, 127
    %v246 = vpop.permute.xlu0 %245
    %247 = vrot.lane.b32.xlu0 %v238, 127
    %v248 = vpop.permute.xlu0 %247
    %v249 = vsel %vm54, %v246, 0.0
    %v250 = vsel %vm54, %v248, 0.0
    %s251 = scalar_lea.vmem %s3, 16
    %v252 = vld [vmem:[%s251] sm:$0xff]
    %v253 = vld [vmem:[%s251 + $0x8] sm:$0xff]
    %s254 = scalar_lea.vmem %s4, 16
    %v255 = vld [vmem:[%s254] sm:$0xff]
    %v256 = vld [vmem:[%s254 + $0x8] sm:$0xff]
    %258 = vset.pattern.permute.xlu0 0
    %259 = vperm.xlu0 %258, %v255
    %v260 = vpop.permute.xlu0 %259
    %263 = vset.pattern.permute.xlu0 0
    %264 = vperm.xlu0 %263, %v256
    %v265 = vpop.permute.xlu0 %264
    %v268 = vsel %vm75, %v252, 0
    %v271 = vsel %vm75, %v253, 0
    %273 = vmatpush.msra.mxu0 0.0
    %274 = vmatpush.msra.mxu0 0.0
    %275 = vmatpush.msra.mxu0 0.0
    %276 = vmatpush.msra.mxu0 0.0
    %277 = vmatpush.msra.mxu0 0.0
    %278 = vmatpush.msra.mxu0 0.0
    %279 = vmatpush.msra.mxu0 0.0
    %280 = vmatpush.msra.mxu0 0.0
    %281 = vmatpush.msra.mxu0 0.0
    %282 = vmatpush.msra.mxu0 0.0
    %283 = vmatpush.msra.mxu0 %v250
    %284 = vmatpush.msra.mxu0 %v249
    %285 = vmatpush.msra.mxu0 %v238
    %286 = vmatpush.msra.mxu0 %v237
    %287 = vmatpush.msra.mxu0 %v244
    %288 = vmatpush.msra.mxu0 %v243
    %289 = vmatmul.f32.gmra.mxu0 %v268
    %v290 = vpop.f32.mrf.mxu0
    %v291 = vadd.f32 %v260, %v290
    %292 = vmatmul.f32.gmra.mxu0 %v271
    %v293 = vpop.f32.mrf.mxu0
    %v294 = vadd.f32 %v265, %v293
    %295 = vdwg.mxu0
    %v296 = vadd.f32 %v166, %v291
    %v297 = vadd.f32 %v167, %v294
    %vm298 = vcmp.ge.f32.partialorder %v296, 0.0
    %vm299 = vcmp.ge.f32.partialorder %v297, 0.0
    %v300 = vmul.f32 %v296, 0.1
    %v301 = vmul.f32 %v297, 0.1
    %v302 = vsel %vm298, %v296, %v300
    %v303 = vsel %vm299, %v297, %v301
    %vm304 = vcmp.ge.s32.totalorder %v40, 5
    %305 = vrot.lane.b32.xlu0 %v302, 5
    %v306 = vpop.permute.xlu0 %305
    %307 = vrot.lane.b32.xlu0 %v303, 5
    %v308 = vpop.permute.xlu0 %307
    %v309 = vsel %vm304, %v306, 0.0
    %v310 = vsel %vm304, %v308, 0.0
    %vm311 = vcmp.lt.s32.totalorder %v40, 123
    %312 = vrot.lane.b32.xlu0 %v302, 123
    %v313 = vpop.permute.xlu0 %312
    %314 = vrot.lane.b32.xlu0 %v303, 123
    %v315 = vpop.permute.xlu0 %314
    %v316 = vsel %vm311, %v313, 0.0
    %v317 = vsel %vm311, %v315, 0.0
    %s318 = scalar_lea.vmem %s1, 32
    %v319 = vld [vmem:[%s318] sm:$0xff]
    %v320 = vld [vmem:[%s318 + $0x8] sm:$0xff]
    %s321 = scalar_lea.vmem %s2, 32
    %v322 = vld [vmem:[%s321] sm:$0xff]
    %v323 = vld [vmem:[%s321 + $0x8] sm:$0xff]
    %325 = vset.pattern.permute.xlu0 0
    %326 = vperm.xlu0 %325, %v322
    %v327 = vpop.permute.xlu0 %326
    %330 = vset.pattern.permute.xlu0 0
    %331 = vperm.xlu0 %330, %v323
    %v332 = vpop.permute.xlu0 %331
    %v335 = vsel %vm75, %v319, 0
    %v338 = vsel %vm75, %v320, 0
    %340 = vmatpush.msra.mxu0 0.0
    %341 = vmatpush.msra.mxu0 0.0
    %342 = vmatpush.msra.mxu0 0.0
    %343 = vmatpush.msra.mxu0 0.0
    %344 = vmatpush.msra.mxu0 0.0
    %345 = vmatpush.msra.mxu0 0.0
    %346 = vmatpush.msra.mxu0 0.0
    %347 = vmatpush.msra.mxu0 0.0
    %348 = vmatpush.msra.mxu0 0.0
    %349 = vmatpush.msra.mxu0 0.0
    %350 = vmatpush.msra.mxu0 %v317
    %351 = vmatpush.msra.mxu0 %v316
    %352 = vmatpush.msra.mxu0 %v303
    %353 = vmatpush.msra.mxu0 %v302
    %354 = vmatpush.msra.mxu0 %v310
    %355 = vmatpush.msra.mxu0 %v309
    %356 = vmatmul.f32.gmra.mxu0 %v335
    %v357 = vpop.f32.mrf.mxu0
    %v358 = vadd.f32 %v327, %v357
    %359 = vmatmul.f32.gmra.mxu0 %v338
    %v360 = vpop.f32.mrf.mxu0
    %v361 = vadd.f32 %v332, %v360
    %362 = vdwg.mxu0
    %vm363 = vcmp.ge.f32.partialorder %v358, 0.0
    %vm364 = vcmp.ge.f32.partialorder %v361, 0.0
    %v365 = vmul.f32 %v358, 0.1
    %v366 = vmul.f32 %v361, 0.1
    %v367 = vsel %vm363, %v358, %v365
    %v368 = vsel %vm364, %v361, %v366
    %369 = vrot.lane.b32.xlu0 %v367, 1
    %v370 = vpop.permute.xlu0 %369
    %371 = vrot.lane.b32.xlu0 %v368, 1
    %v372 = vpop.permute.xlu0 %371
    %v373 = vsel %vm47, %v370, 0.0
    %v374 = vsel %vm47, %v372, 0.0
    %375 = vrot.lane.b32.xlu0 %v367, 127
    %v376 = vpop.permute.xlu0 %375
    %377 = vrot.lane.b32.xlu0 %v368, 127
    %v378 = vpop.permute.xlu0 %377
    %v379 = vsel %vm54, %v376, 0.0
    %v380 = vsel %vm54, %v378, 0.0
    %s381 = scalar_lea.vmem %s3, 32
    %v382 = vld [vmem:[%s381] sm:$0xff]
    %v383 = vld [vmem:[%s381 + $0x8] sm:$0xff]
    %s384 = scalar_lea.vmem %s4, 32
    %v385 = vld [vmem:[%s384] sm:$0xff]
    %v386 = vld [vmem:[%s384 + $0x8] sm:$0xff]
    %388 = vset.pattern.permute.xlu0 0
    %389 = vperm.xlu0 %388, %v385
    %v390 = vpop.permute.xlu0 %389
    %393 = vset.pattern.permute.xlu0 0
    %394 = vperm.xlu0 %393, %v386
    %v395 = vpop.permute.xlu0 %394
    %v398 = vsel %vm75, %v382, 0
    %v401 = vsel %vm75, %v383, 0
    %403 = vmatpush.msra.mxu0 0.0
    %404 = vmatpush.msra.mxu0 0.0
    %405 = vmatpush.msra.mxu0 0.0
    %406 = vmatpush.msra.mxu0 0.0
    %407 = vmatpush.msra.mxu0 0.0
    %408 = vmatpush.msra.mxu0 0.0
    %409 = vmatpush.msra.mxu0 0.0
    %410 = vmatpush.msra.mxu0 0.0
    %411 = vmatpush.msra.mxu0 0.0
    %412 = vmatpush.msra.mxu0 0.0
    %413 = vmatpush.msra.mxu0 %v380
    %414 = vmatpush.msra.mxu0 %v379
    %415 = vmatpush.msra.mxu0 %v368
    %416 = vmatpush.msra.mxu0 %v367
    %417 = vmatpush.msra.mxu0 %v374
    %418 = vmatpush.msra.mxu0 %v373
    %419 = vmatmul.f32.gmra.mxu0 %v398
    %v420 = vpop.f32.mrf.mxu0
    %v421 = vadd.f32 %v390, %v420
    %422 = vmatmul.f32.gmra.mxu0 %v401
    %v423 = vpop.f32.mrf.mxu0
    %v424 = vadd.f32 %v395, %v423
    %425 = vdwg.mxu0
    %v426 = vadd.f32 %v296, %v421
    %v427 = vadd.f32 %v297, %v424
    %428 = vst [vmem:[#allocation5] sm:$0xff] %v426
    %429 = vst [vmem:[#allocation5 + $0x8] sm:$0xff] %v427
    // Predicated region
    $region26: #{tpu_custom_call.1} parent=1 // pred_check
      _
    $region27: #{tpu_custom_call.1} parent=1 // pred_check_branch
      %431 = sbr.rel (0) target = $region29
    $region28: #{tpu_custom_call.1} parent=1 // pred_region
      %433 = vsyncadd [#allocation4], 0
      %s434 = sshll.u32 [#allocation5], 4
      %s435 = int_to_ptr.vmem [resolvable:$true] %s434
      %s436 = sshll.u32 %s5, 4
      %s437 = int_to_ptr.hbm [resolvable:$true] %s436
      %442 = dma.vmem_to_hbm [thread:$0]  %s435, 256, %s437, [#allocation4], 128, 128, 8
    $region29: #{tpu_custom_call.1} parent=1 // pred_fallthru
      _
    // Predicated region
    $region30: #{tpu_custom_call.1} parent=1 // pred_check
      _
    $region31: #{tpu_custom_call.1} parent=1 // pred_check_branch
      %444 = sbr.rel (0) target = $region33
    $region32: #{tpu_custom_call.1} parent=1 // pred_region
      %446 = dma.done [#allocation4], 256
    $region33: #{tpu_custom_call.1} parent=1 // pred_fallthru
      _
    %447 = vsyncpa [#allocation3], 1
    %448 = vsyncpa [#allocation4], 1

</llo_original>
